<compile_context>
chip_gen: v5e
topology: v5e:2x2
jax: 0.10.0
libtpu: 0.0.40
codegen_flags: <defaults>
</compile_context>

<pallas_src>
import jax
import jax.numpy as jnp
from jax.experimental import pallas as pl
from jax.experimental.pallas import tpu as pltpu

_LANE = 128                      # vreg lane width / minor tiling quantum
_FAST_PATH_MAX_BYTES = 1 << 20   # below ~1 MiB output, XLA slice beats any kernel


def _view_cut_kernel(x_ref, o_ref):
    # x_ref: (bb, tc_in) VMEM tile; o_ref: (bb, tc_out) tile, tc_out <= tc_in.
    # Pure pass-through of the kept prefix.  When tc_in == tc_out this is a
    # straight copy; otherwise a static lane-slice in VMEM (only used in the
    # small (N-1)*M < 128 path).
    o_ref[...] = x_ref[:, : o_ref.shape[1]]


def _per_buffer_budget_bytes() -> int:
    """Generation-aware per-buffer VMEM target (soft cap)."""
    try:
        cap = pltpu.get_tpu_info().vmem_capacity_bytes
    except Exception:  # query unavailable -> safest choice
        return 3 << 20
    if cap <= (64 << 20):
        # v7x-class part (64 MiB VMEM/TC, ~3.2 TB/s HBM): bigger tiles amortize
        # the ~0.35 us/step overhead; 4 x 6 MiB stays inside the 32 MiB scoped
        # default with headroom.
        return 6 << 20
    # v5e/v6e (128 MiB physical): keep 3 MiB so 2xin + 2xout ~= 12 MiB fits
    # v5e's 16 MiB scoped default without a vmem_limit_bytes override.
    return 3 << 20


def view_cut(x: jax.Array, *, force_pallas: bool = False,
             target_tile_bytes: int | None = None) -> jax.Array:
    """x[:, :-1, :] for a 3-D array (B, N, M)."""
    B, N, M = x.shape
    assert N >= 2, "need at least 2 rows to cut one"
    n_out = N - 1
    itemsize = jnp.dtype(x.dtype).itemsize

    # ---- standalone / tiny-shape fast path: a plain XLA slice ----
    if not force_pallas and B * n_out * M * itemsize <= _FAST_PATH_MAX_BYTES:
        return x[:, :-1, :]

    budget = target_tile_bytes if target_tile_bytes is not None \
        else _per_buffer_budget_bytes()
    # sublane packing of the second-minor dim: 8 (4B), 16 (2B), 32 (1B) dtypes
    sublane = max(8, 32 // itemsize)

    # 2-D contiguous view: per batch row, the kept prefix is the first
    # (N-1)*M elements of the N*M row.
    w_in = N * M
    w_out = n_out * M
    x2d = x.reshape(B, w_in)

    # ---- column (lane) tile ----
    if w_out < _LANE:
        # Too narrow to be lane-dense: single column block = full widths
        # (legal because it equals the array dims).  The dropped row is read
        # but sliced off in VMEM -- harmless at this size.
        tc_out, tc_in = w_out, w_in
    else:
        max_tc = max(_LANE, (budget // (sublane * itemsize)) // _LANE * _LANE)
        if w_out % _LANE == 0:
            tc_out = tc_in = min(max_tc, w_out)      # never reads dropped tail
        else:
            tc_out = tc_in = min(max_tc, max(_LANE, (w_out // _LANE) * _LANE))

    # ---- batch (sublane) tile: pack as many batch rows as fit the budget ----
    row_budget = max(1, budget // (max(tc_in, tc_out) * itemsize))
    if row_budget >= B:
        bb = B                                        # full dim -> always legal
    else:
        bb = max(sublane, (row_budget // sublane) * sublane)

    grid = (pl.cdiv(B, bb), pl.cdiv(w_out, tc_out))

    out2d = pl.pallas_call(
        _view_cut_kernel,
        out_shape=jax.ShapeDtypeStruct((B, w_out), x.dtype),
        grid_spec=pltpu.PrefetchScalarGridSpec(
            num_scalar_prefetch=0,
            grid=grid,
            in_specs=[pl.BlockSpec((bb, tc_in), lambda b, c: (b, c))],
            out_specs=pl.BlockSpec((bb, tc_out), lambda b, c: (b, c)),
        ),
        compiler_params=pltpu.CompilerParams(
            # every output block written exactly once -> fully parallel grid
            dimension_semantics=("parallel", "parallel"),
        ),
        cost_estimate=pl.CostEstimate(
            flops=0,
            transcendentals=0,
            bytes_accessed=2 * B * w_out * itemsize,
        ),
    )(x2d)

    return out2d.reshape(B, n_out, M)


if __name__ == "__main__":
    key = jax.random.PRNGKey(0)
    k1, k2, k3, k4 = jax.random.split(key, 4)

    # 1) Module-like small shape, default call -> XLA fast path.
    x1 = jax.random.normal(k1, (2, 8, 16), dtype=jnp.float32)
    o1 = jax.block_until_ready(view_cut(x1))
    assert o1.shape == (2, 7, 16) and o1.dtype == x1.dtype
    assert jnp.array_equal(o1, x1[:, :-1, :]), "mismatch (fast path)"

    # 2) Same shape, forced through the Pallas kernel:
    #    (N-1)*M = 112 < 128 -> single-block path with in-VMEM prefix slice.
    o1p = jax.block_until_ready(view_cut(x1, force_pallas=True))
    assert jnp.array_equal(o1p, x1[:, :-1, :]), "mismatch (pallas, narrow path)"

    # 3) Lane-dense path: (N-1)*M = 256 is a multiple of 128, dropped row
    #    never DMA'd, full batch packed into one block.
    x2 = jax.random.normal(k2, (4, 9, 32), dtype=jnp.float32)
    o2 = jax.block_until_ready(view_cut(x2, force_pallas=True))
    assert jnp.array_equal(o2, x2[:, :-1, :]), "mismatch (pallas, lane-dense path)"

    # 4) Tiny tile budget forces batch tiling (bb=8) + column tiling (tc=128)
    #    with masked boundary blocks on the column axis.
    x3 = jax.random.normal(k3, (16, 10, 32), dtype=jnp.float32)
    o3 = jax.block_until_ready(view_cut(x3, force_pallas=True,
                                        target_tile_bytes=4096))
    assert jnp.array_equal(o3, x3[:, :-1, :]), "mismatch (pallas, tiled path)"

    # 5) bf16 (16-row sublane packing) coverage.
    x4 = jax.random.normal(k4, (2, 9, 64), dtype=jnp.bfloat16)
    o4 = jax.block_until_ready(view_cut(x4, force_pallas=True))
    assert jnp.array_equal(o4, x4[:, :-1, :]), "mismatch (pallas, bf16 path)"

    print("KERNEL_OK")
</pallas_src>

<mosaic_0001>
module attributes {stable_mosaic.version = 11 : i64} {
  func.func @_view_cut_kernel(%arg0: i32, %arg1: i32, %arg2: memref<2x128xf32, #tpu.memory_space<vmem>>, %arg3: memref<2x112xf32, #tpu.memory_space<vmem>>) attributes {dimension_semantics = [#tpu.dimension_semantics<parallel>, #tpu.dimension_semantics<parallel>], iteration_bounds = array<i64: 1, 1>, scalar_prefetch = 0 : i64, scratch_operands = 0 : i64, tpu.core_type = #tpu.core_type<tc>, window_params = [{transform_indices = @transform_0, window_bounds = array<i64: 2, 128>}, {transform_indices = @transform_1, window_bounds = array<i64: 2, 112>}]} {
    %c0 = arith.constant 0 : index
    %c0_0 = arith.constant 0 : index
    %0 = vector.load %arg2[%c0, %c0_0] : memref<2x128xf32, #tpu.memory_space<vmem>>, vector<2x112xf32>
    %c0_1 = arith.constant 0 : index
    %c0_2 = arith.constant 0 : index
    %1 = vector.load %arg3[%c0_1, %c0_2] : memref<2x112xf32, #tpu.memory_space<vmem>>, vector<2x112xf32>
    tpu.vector_store %arg3[%c0_1, %c0_2], %0 {strides = array<i32>} : memref<2x112xf32, #tpu.memory_space<vmem>>, vector<2x112xf32>,
    return
  }
  func.func @transform_0(%arg0: i32, %arg1: i32) -> (i32, i32) {
    %c0_i32 = arith.constant 0 : i32
    return %arg0, %arg1 : i32, i32
  }
  func.func @transform_1(%arg0: i32, %arg1: i32) -> (i32, i32) {
    %c0_i32 = arith.constant 0 : i32
    return %arg0, %arg1 : i32, i32
  }
}

</mosaic_0001>

<llo_original>
// kernel: tpu_custom_call.1
$region0: #{tpu_custom_call.1}
  #allocation0 [shape = 'u32[]', space=smem, size = 0x4, offset = 0x4, fixed_abs, tag = 'smem constant byte address 0x4 - core index']
  #allocation1 [shape = 'u32[72,128]{1,0:T(1,128)}', space=vmem, size = 0x9000, scoped, tag = 'internal scratch']
  %s0 = inlined_call_operand.hbm [shape: f32[2,128], index: 0, kind: input, shape index: {}]
  %s1 = inlined_call_operand.hbm [shape: f32[2,112], index: 1, kind: output, shape index: {}]
  %s2 = sld [smem:[#allocation0]]
  $region18: #{tpu_custom_call.1} parent=0
    _
  %s4 = ssub.s32 1, %s2
  %s5 = scalar_select 0, %s4, %s2
  $region1: #{tpu_custom_call.1} parent=0
    #allocation2 [shape = 'u8[1024]{0}', space=vmem, size = 0x400, scoped, tag = 'input window, operand 0, single buffered']
    #allocation3 [shape = 's32[1]{0}', space=sflag, size = 0x4, scoped, tag = 'scoped memory for tpu_custom_call.1']
    #allocation4 [shape = 's32[1]{0}', space=sflag, size = 0x4, scoped, tag = 'scoped memory for tpu_custom_call.1']
    #allocation5 [shape = 'u8[1024]{0}', space=vmem, size = 0x400, scoped, tag = 'output window, operand 0, single buffered']
    %6 = vsyncpa [#allocation3], 0
    %7 = vsyncpa [#allocation4], 0
    // Predicated region
    $region2: #{tpu_custom_call.1} parent=1 // pred_check
      _
    $region3: #{tpu_custom_call.1} parent=1 // pred_check_branch
      %9 = sbr.rel (0) target = $region5
    $region4: #{tpu_custom_call.1} parent=1 // pred_region
      %11 = vsyncadd [#allocation3], 0
      %s13 = sshll.u32 %s0, 4
      %s14 = int_to_ptr.hbm [resolvable:$true] %s13
      %s15 = sshll.u32 [#allocation2], 4
      %s16 = int_to_ptr.vmem [resolvable:$true] %s15
      %18 = dma.hbm_to_vmem [thread:$0]  %s14, 32, %s16, [#allocation3]
    $region5: #{tpu_custom_call.1} parent=1 // pred_fallthru
      _
    // Predicated region
    $region6: #{tpu_custom_call.1} parent=1 // pred_check
      _
    $region7: #{tpu_custom_call.1} parent=1 // pred_check_branch
      %20 = sbr.rel (0) target = $region9
    $region8: #{tpu_custom_call.1} parent=1 // pred_region
      %22 = dma.done [#allocation3], 32
    $region9: #{tpu_custom_call.1} parent=1 // pred_fallthru
      _
    %v23 = vld [vmem:[#allocation2] sm:$0x3]
    %vm24 = vcmask 910336
    %25 = vst.msk [vmem:[#allocation5] sm:$0x3] %vm24, %v23
    // Predicated region
    $region10: #{tpu_custom_call.1} parent=1 // pred_check
      _
    $region11: #{tpu_custom_call.1} parent=1 // pred_check_branch
      %27 = sbr.rel (0) target = $region13
    $region12: #{tpu_custom_call.1} parent=1 // pred_region
      %29 = vsyncadd [#allocation4], 0
      %s31 = sshll.u32 [#allocation5], 4
      %s32 = int_to_ptr.vmem [resolvable:$true] %s31
      %s33 = sshll.u32 %s1, 4
      %s34 = int_to_ptr.hbm [resolvable:$true] %s33
      %36 = dma.vmem_to_hbm [thread:$0]  %s32, 32, %s34, [#allocation4]
    $region13: #{tpu_custom_call.1} parent=1 // pred_fallthru
      _
    // Predicated region
    $region14: #{tpu_custom_call.1} parent=1 // pred_check
      _
    $region15: #{tpu_custom_call.1} parent=1 // pred_check_branch
      %38 = sbr.rel (0) target = $region17
    $region16: #{tpu_custom_call.1} parent=1 // pred_region
      %40 = dma.done [#allocation4], 32
    $region17: #{tpu_custom_call.1} parent=1 // pred_fallthru
      _
    %41 = vsyncpa [#allocation3], 1
    %42 = vsyncpa [#allocation4], 1

</llo_original>
